<compile_context>
chip_gen: v5e
topology: v5e:2x2
jax: 0.10.0
libtpu: 0.0.40
codegen_flags: <defaults>
</compile_context>

<pallas_src>
import functools

import jax
import jax.numpy as jnp
from jax.experimental import pallas as pl
from jax.experimental.pallas import tpu as pltpu

LANE = 128  # TPU vreg lane width


def _decoder_kernel(n_layers, *refs):
    # refs = (z_ref, c_ref, w0z, w0c, b0, w1, b1, ..., w_{n-1}, b_{n-1}, out_ref)
    z_ref, c_ref = refs[0], refs[1]
    out_ref = refs[-1]
    params = refs[2:-1]

    w0z_ref, w0c_ref, b0_ref = params[0], params[1], params[2]

    # Layer 0: fused-concat matmul (z and c hit the MXU separately; identical
    # to cat([z, c]) @ W0 since W0 is split row-wise).
    h = (
        jnp.dot(z_ref[...], w0z_ref[...], preferred_element_type=jnp.float32)
        + jnp.dot(c_ref[...], w0c_ref[...], preferred_element_type=jnp.float32)
        + b0_ref[...]
    )
    if n_layers > 1:
        h = jnp.maximum(h, 0.0)  # ReLU (VPU)

    # Remaining layers (Python loop -> fully unrolled; shapes differ per layer).
    for i in range(1, n_layers):
        w_ref = params[1 + 2 * i]
        b_ref = params[2 + 2 * i]
        h = jnp.dot(h, w_ref[...], preferred_element_type=jnp.float32) + b_ref[...]
        if i + 1 < n_layers:
            h = jnp.maximum(h, 0.0)  # ReLU (VPU)

    # Final sigmoid: exp goes to the EUP slot, remainder is cheap VPU work.
    out_ref[...] = (1.0 / (1.0 + jnp.exp(-h))).astype(out_ref.dtype)


def decoder_forward(z, c, weights, biases, *, block_b=256):
    """z: [B, latent], c: [B, cond]; weights[i]: [in_i, out_i]; biases[i]: [1, out_i]."""
    B, latent = z.shape
    cond = c.shape[1]
    n_layers = len(weights)
    out_dim = weights[-1].shape[1]

    weights = list(weights)
    biases = list(biases)

    # Lane-pad the final layer so the output writeback is unmasked 128-lane
    # stores; padded columns are exactly zero through the last matmul and are
    # sliced off below (sigmoid(0)=0.5 lands only in discarded columns).
    padded_out = pl.cdiv(out_dim, LANE) * LANE
    if padded_out != out_dim:
        pad = padded_out - out_dim
        weights[-1] = jnp.pad(weights[-1], ((0, 0), (0, pad)))
        biases[-1] = jnp.pad(biases[-1], ((0, 0), (0, pad)))

    # Batch tile: full batch if small, otherwise an 8-aligned tile of block_b rows.
    TB = block_b if B >= block_b else B
    assert TB % 8 == 0 or TB == B, "batch tile should be a multiple of 8 sublanes"
    grid = (pl.cdiv(B, TB),)

    # Split the first weight so the z/c concat folds into the first matmul.
    w0 = weights[0]
    w0z, w0c = w0[:latent], w0[latent:]

    args = [z, c, w0z, w0c, biases[0]]
    in_specs = [
        pl.BlockSpec((TB, latent), lambda i: (i, 0)),
        pl.BlockSpec((TB, cond), lambda i: (i, 0)),
        pl.BlockSpec(w0z.shape, lambda i: (0, 0)),   # resident across batch tiles
        pl.BlockSpec(w0c.shape, lambda i: (0, 0)),
        pl.BlockSpec(biases[0].shape, lambda i: (0, 0)),
    ]
    for w, b in zip(weights[1:], biases[1:]):
        args.append(w)
        args.append(b)
        in_specs.append(pl.BlockSpec(w.shape, lambda i: (0, 0)))
        in_specs.append(pl.BlockSpec(b.shape, lambda i: (0, 0)))

    kernel = functools.partial(_decoder_kernel, n_layers)

    # VMEM budget: resident params + double-buffered activation/output tiles,
    # with generous headroom; clamped so it is valid on v5e/v6e/v7x alike.
    itemsize = 4
    param_bytes = itemsize * (
        sum(int(w.size) for w in weights) + sum(int(b.size) for b in biases)
    )
    widest = max([latent, cond, padded_out] + [w.shape[1] for w in weights])
    act_bytes = 2 * 2 * TB * widest * itemsize  # double-buffered in/out blocks + temps
    vmem_limit = int(min(64 << 20, max(16 << 20, 4 * (param_bytes + act_bytes))))

    flops = 2 * B * sum(w.shape[0] * w.shape[1] for w in weights)
    bytes_accessed = itemsize * (
        B * (latent + cond) + B * padded_out
        + sum(int(w.size) for w in weights) + sum(int(b.size) for b in biases)
    )

    out = pl.pallas_call(
        kernel,
        grid=grid,
        out_shape=jax.ShapeDtypeStruct((B, padded_out), jnp.float32),
        in_specs=in_specs,
        out_specs=pl.BlockSpec((TB, padded_out), lambda i: (i, 0)),
        compiler_params=pltpu.CompilerParams(
            dimension_semantics=("parallel",),   # megacore sharding
            vmem_limit_bytes=vmem_limit,
        ),
        cost_estimate=pl.CostEstimate(
            flops=flops,
            transcendentals=B * padded_out,  # sigmoid exp
            bytes_accessed=bytes_accessed,
        ),
    )(*args)

    if padded_out != out_dim:
        out = out[:, :out_dim]
    return out


def init_decoder_params(key, layer_sizes, latent_size, cond_size):
    """Deterministic init mimicking nn.Linear default (uniform +/- 1/sqrt(fan_in))."""
    input_size = latent_size + cond_size
    in_sizes = [input_size] + list(layer_sizes[:-1])
    weights, biases = [], []
    for in_size, out_size in zip(in_sizes, layer_sizes):
        key, kw, kb = jax.random.split(key, 3)
        bound = 1.0 / jnp.sqrt(jnp.float32(in_size))
        # stored as [in, out] (transpose of PyTorch's [out, in])
        w = jax.random.uniform(kw, (in_size, out_size), jnp.float32, -bound, bound)
        b = jax.random.uniform(kb, (1, out_size), jnp.float32, -bound, bound)
        weights.append(w)
        biases.append(b)
    return weights, biases


def decoder_reference(z, c, weights, biases):
    """Pure-JAX reference for correctness check."""
    x = jnp.concatenate([z, c], axis=-1)
    n = len(weights)
    for i, (w, b) in enumerate(zip(weights, biases)):
        x = x @ w + b
        x = jnp.maximum(x, 0.0) if i + 1 < n else jax.nn.sigmoid(x)
    return x


if __name__ == "__main__":
    # Small shapes consistent with the module's forward.
    batch = 64
    latent_size = 8
    cond_size = 8
    layer_sizes = [64, 32]  # hidden -> output (last layer gets sigmoid)

    key = jax.random.PRNGKey(0)
    kz, kc, kp = jax.random.split(key, 3)
    z = jax.random.normal(kz, (batch, latent_size), jnp.float32)
    c = jax.random.normal(kc, (batch, cond_size), jnp.float32)

    weights, biases = init_decoder_params(kp, layer_sizes, latent_size, cond_size)

    # block_b=16 -> 4 batch tiles so the pipelined grid path is exercised even
    # at this small batch size (production sizes would use block_b=256..1024).
    out = decoder_forward(z, c, weights, biases, block_b=16)
    out = jax.block_until_ready(out)

    ref = decoder_reference(z, c, weights, biases)
    assert out.shape == (batch, layer_sizes[-1])
    assert jnp.allclose(out, ref, atol=1e-5, rtol=1e-5)

    print("KERNEL_OK")
</pallas_src>

<mosaic_0001>
module attributes {stable_mosaic.version = 11 : i64} {
  func.func @_decoder_kernel(%arg0: i32, %arg1: memref<16x8xf32, #tpu.memory_space<vmem>>, %arg2: memref<16x8xf32, #tpu.memory_space<vmem>>, %arg3: memref<8x64xf32, #tpu.memory_space<vmem>>, %arg4: memref<8x64xf32, #tpu.memory_space<vmem>>, %arg5: memref<1x64xf32, #tpu.memory_space<vmem>>, %arg6: memref<64x128xf32, #tpu.memory_space<vmem>>, %arg7: memref<1x128xf32, #tpu.memory_space<vmem>>, %arg8: memref<16x128xf32, #tpu.memory_space<vmem>>) attributes {dimension_semantics = [#tpu.dimension_semantics<parallel>], iteration_bounds = array<i64: 4>, scalar_prefetch = 0 : i64, scratch_operands = 0 : i64, tpu.core_type = #tpu.core_type<tc>, window_params = [{transform_indices = @transform_0, window_bounds = array<i64: 16, 8>}, {transform_indices = @transform_1, window_bounds = array<i64: 16, 8>}, {pipeline_mode = #tpu.pipeline_mode<synchronous>, transform_indices = @transform_2, window_bounds = array<i64: 8, 64>}, {pipeline_mode = #tpu.pipeline_mode<synchronous>, transform_indices = @transform_3, window_bounds = array<i64: 8, 64>}, {pipeline_mode = #tpu.pipeline_mode<synchronous>, transform_indices = @transform_4, window_bounds = array<i64: 1, 64>}, {pipeline_mode = #tpu.pipeline_mode<synchronous>, transform_indices = @transform_5, window_bounds = array<i64: 64, 128>}, {pipeline_mode = #tpu.pipeline_mode<synchronous>, transform_indices = @transform_6, window_bounds = array<i64: 1, 128>}, {transform_indices = @transform_7, window_bounds = array<i64: 16, 128>}]} {
    %c0 = arith.constant 0 : index
    %c0_0 = arith.constant 0 : index
    %0 = vector.load %arg1[%c0, %c0_0] : memref<16x8xf32, #tpu.memory_space<vmem>>, vector<16x8xf32>
    %c0_1 = arith.constant 0 : index
    %c0_2 = arith.constant 0 : index
    %1 = vector.load %arg3[%c0_1, %c0_2] : memref<8x64xf32, #tpu.memory_space<vmem>>, vector<8x64xf32>
    %cst = arith.constant dense<0.000000e+00> : vector<16x64xf32>
    %2 = tpu.matmul %0, %1, %cst {dimension_numbers = #tpu.dot_dimension_numbers<[1], [0], [0], [1], [0, 0, 1, 1], [], []>} : vector<16x8xf32>, vector<8x64xf32>, vector<16x64xf32> -> vector<16x64xf32>
    %c0_3 = arith.constant 0 : index
    %c0_4 = arith.constant 0 : index
    %3 = vector.load %arg2[%c0_3, %c0_4] : memref<16x8xf32, #tpu.memory_space<vmem>>, vector<16x8xf32>
    %c0_5 = arith.constant 0 : index
    %c0_6 = arith.constant 0 : index
    %4 = vector.load %arg4[%c0_5, %c0_6] : memref<8x64xf32, #tpu.memory_space<vmem>>, vector<8x64xf32>
    %cst_7 = arith.constant dense<0.000000e+00> : vector<16x64xf32>
    %5 = tpu.matmul %3, %4, %cst_7 {dimension_numbers = #tpu.dot_dimension_numbers<[1], [0], [0], [1], [0, 0, 1, 1], [], []>} : vector<16x8xf32>, vector<8x64xf32>, vector<16x64xf32> -> vector<16x64xf32>
    %6 = arith.addf %2, %5 : vector<16x64xf32>
    %c0_8 = arith.constant 0 : index
    %c0_9 = arith.constant 0 : index
    %7 = vector.load %arg5[%c0_8, %c0_9] : memref<1x64xf32, #tpu.memory_space<vmem>>, vector<1x64xf32>
    %8 = vector.broadcast %7 : vector<1x64xf32> to vector<16x64xf32>
    %9 = arith.addf %6, %8 : vector<16x64xf32>
    %cst_10 = arith.constant 0.000000e+00 : f32
    %10 = vector.broadcast %cst_10 : f32 to vector<16x64xf32>
    %11 = arith.maximumf %9, %10 : vector<16x64xf32>
    %c0_11 = arith.constant 0 : index
    %c0_12 = arith.constant 0 : index
    %12 = vector.load %arg6[%c0_11, %c0_12] : memref<64x128xf32, #tpu.memory_space<vmem>>, vector<64x128xf32>
    %cst_13 = arith.constant dense<0.000000e+00> : vector<16x128xf32>
    %13 = tpu.matmul %11, %12, %cst_13 {dimension_numbers = #tpu.dot_dimension_numbers<[1], [0], [0], [1], [0, 0, 1, 1], [], []>} : vector<16x64xf32>, vector<64x128xf32>, vector<16x128xf32> -> vector<16x128xf32>
    %c0_14 = arith.constant 0 : index
    %c0_15 = arith.constant 0 : index
    %14 = vector.load %arg7[%c0_14, %c0_15] : memref<1x128xf32, #tpu.memory_space<vmem>>, vector<1x128xf32>
    %15 = vector.broadcast %14 : vector<1x128xf32> to vector<16x128xf32>
    %16 = arith.addf %13, %15 : vector<16x128xf32>
    %cst_16 = arith.constant 0.000000e+00 : f32
    %17 = vector.broadcast %cst_16 : f32 to vector<16x128xf32>
    %18 = arith.subf %17, %16 : vector<16x128xf32>
    %19 = math.exp %18 : vector<16x128xf32>
    %cst_17 = arith.constant 1.000000e+00 : f32
    %20 = vector.broadcast %cst_17 : f32 to vector<16x128xf32>
    %21 = arith.addf %20, %19 : vector<16x128xf32>
    %cst_18 = arith.constant 1.000000e+00 : f32
    %22 = vector.broadcast %cst_18 : f32 to vector<16x128xf32>
    %23 = arith.divf %22, %21 : vector<16x128xf32>
    %c0_19 = arith.constant 0 : index
    %c0_20 = arith.constant 0 : index
    %24 = vector.load %arg8[%c0_19, %c0_20] : memref<16x128xf32, #tpu.memory_space<vmem>>, vector<16x128xf32>
    tpu.vector_store %arg8[%c0_19, %c0_20], %23 {strides = array<i32>} : memref<16x128xf32, #tpu.memory_space<vmem>>, vector<16x128xf32>,
    return
  }
  func.func @transform_0(%arg0: i32) -> (i32, i32) {
    %c0_i32 = arith.constant 0 : i32
    %c0_i32_0 = arith.constant 0 : i32
    return %arg0, %c0_i32 : i32, i32
  }
  func.func @transform_1(%arg0: i32) -> (i32, i32) {
    %c0_i32 = arith.constant 0 : i32
    %c0_i32_0 = arith.constant 0 : i32
    return %arg0, %c0_i32 : i32, i32
  }
  func.func @transform_2(%arg0: i32) -> (i32, i32) {
    %c0_i32 = arith.constant 0 : i32
    %c0_i32_0 = arith.constant 0 : i32
    %c0_i32_1 = arith.constant 0 : i32
    return %c0_i32, %c0_i32_0 : i32, i32
  }
  func.func @transform_3(%arg0: i32) -> (i32, i32) {
    %c0_i32 = arith.constant 0 : i32
    %c0_i32_0 = arith.constant 0 : i32
    %c0_i32_1 = arith.constant 0 : i32
    return %c0_i32, %c0_i32_0 : i32, i32
  }
  func.func @transform_4(%arg0: i32) -> (i32, i32) {
    %c0_i32 = arith.constant 0 : i32
    %c0_i32_0 = arith.constant 0 : i32
    %c0_i32_1 = arith.constant 0 : i32
    return %c0_i32, %c0_i32_0 : i32, i32
  }
  func.func @transform_5(%arg0: i32) -> (i32, i32) {
    %c0_i32 = arith.constant 0 : i32
    %c0_i32_0 = arith.constant 0 : i32
    %c0_i32_1 = arith.constant 0 : i32
    return %c0_i32, %c0_i32_0 : i32, i32
  }
  func.func @transform_6(%arg0: i32) -> (i32, i32) {
    %c0_i32 = arith.constant 0 : i32
    %c0_i32_0 = arith.constant 0 : i32
    %c0_i32_1 = arith.constant 0 : i32
    return %c0_i32, %c0_i32_0 : i32, i32
  }
  func.func @transform_7(%arg0: i32) -> (i32, i32) {
    %c0_i32 = arith.constant 0 : i32
    %c0_i32_0 = arith.constant 0 : i32
    return %arg0, %c0_i32 : i32, i32
  }
}

</mosaic_0001>

<llo_original>
// kernel: tpu_custom_call.1
$region0: #{tpu_custom_call.1}
  #allocation0 [shape = 'u32[]', space=smem, size = 0x4, offset = 0x4, fixed_abs, tag = 'smem constant byte address 0x4 - core index']
  #allocation1 [shape = 'u32[72,128]{1,0:T(1,128)}', space=vmem, size = 0x9000, scoped, tag = 'internal scratch']
  %s0 = inlined_call_operand.vmem [shape: f32[64,8], index: 0, kind: input, shape index: {}]
  %s1 = inlined_call_operand.vmem [shape: f32[64,8], index: 1, kind: input, shape index: {}]
  %s2 = inlined_call_operand.vmem [shape: f32[8,64], index: 2, kind: input, shape index: {}]
  %s3 = inlined_call_operand.vmem [shape: f32[8,64], index: 3, kind: input, shape index: {}]
  %s4 = inlined_call_operand.vmem [shape: f32[1,64], index: 4, kind: input, shape index: {}]
  %s5 = inlined_call_operand.vmem [shape: f32[64,128], index: 5, kind: input, shape index: {}]
  %s6 = inlined_call_operand.vmem [shape: f32[1,128], index: 6, kind: input, shape index: {}]
  %s7 = inlined_call_operand.hbm [shape: f32[64,128], index: 7, kind: output, shape index: {}]
  %s8 = sld [smem:[#allocation0]]
  $region61: #{tpu_custom_call.1} parent=0
    _
  %s10 = ssub.s32 1, %s8
  %s11 = scalar_select 0, %s10, %s8
  $region1: #{tpu_custom_call.1} parent=0
    #allocation2 [shape = 'u8[16384]{0}', space=vmem, size = 0x4000, scoped, tag = 'output window, operand 0']
    #allocation3 [shape = 's32[2]{0}', space=sflag, size = 0x8, scoped, tag = 'scoped memory for tpu_custom_call.1']
    %12 = vsyncpa [#allocation3], 0
    %s13 = scalar_lea.sflag [#allocation3], 1
    %14 = vsyncpa %s13, 0
    loop: start=0, step=1, limit=6
    $region2: #{tpu_custom_call.1} parent=1 // loop_pre_header
      _
    $region3: #{tpu_custom_call.1} parent=1 // loop_header
      %s16 = sphi 0, %s20
      %p17 = scmp.ge.s32.totalorder %s16, 6
      %s26 = sphi 0, %s28
      %s29 = sphi 0, %s26
      %s30 = sphi 0, %s29
      %s46 = sphi 0, %s30
      %s52 = sphi 0, %s54
      %s55 = sphi 0, %s52
      %s56 = sphi 0, %s55
      %s72 = sphi 0, %s56
      %s76 = sphi 0, %s76
      %s78 = sphi 0, %s76
      %s79 = sphi 0, %s78
      %s93 = sphi 0, %s79
      %s97 = sphi 0, %s97
      %s99 = sphi 0, %s97
      %s100 = sphi 0, %s99
      %s114 = sphi 0, %s100
      %s118 = sphi 0, %s118
      %s120 = sphi 0, %s118
      %s121 = sphi 0, %s120
      %s135 = sphi 0, %s121
      %s139 = sphi 0, %s139
      %s141 = sphi 0, %s139
      %s142 = sphi 0, %s141
      %s156 = sphi 0, %s142
      %s160 = sphi 0, %s160
      %s162 = sphi 0, %s160
      %s163 = sphi 0, %s162
      %s177 = sphi 0, %s163
      %s183 = sphi 0, %s185
      %s186 = sphi 0, %s183
      %s187 = sphi 0, %s186
      %s203 = sphi 0, %s187
    $region4: #{tpu_custom_call.1} parent=1 // loop_header_branch
      %19 = sbr.rel (%p17) target = $region8
    $region5: #{tpu_custom_call.1} parent=1 // loop_body
      %s21 = ssub.s32 %s16, 1
      %s22 = ssub.s32 %s16, 2
      %s23 = sadd.s32 %s16, 1
      %s24 = ssub.s32 %s16, %s23
      %p25 = scmp.eq.s32.totalorder %s24, 0
      %s27 = sadd.s32 %s26, 1
      %s28 = scalar_select %p25, %s26, %s27
      %p31 = pneg %p25
      %p32 = scmp.eq.s32.totalorder %s16, 3
      %p33 = por %p31, %p32
      %p34 = scmp.ne.s32.totalorder %s26, %s29
      %p35 = scmp.eq.s32.totalorder %s16, 0
      %p36 = por %p34, %p35
      %p37 = scmp.ne.s32.totalorder %s26, %s29
      %p38 = scmp.eq.s32.totalorder %s21, 3
      %p39 = por %p37, %p38
      %p40 = scmp.ne.s32.totalorder %s29, %s30
      %p41 = scmp.eq.s32.totalorder %s21, 0
      %p42 = por %p40, %p41
      %p43 = scmp.ne.s32.totalorder %s29, %s30
      %p44 = scmp.eq.s32.totalorder %s22, 3
      %p45 = por %p43, %p44
      %p47 = scmp.ne.s32.totalorder %s30, %s46
      %p48 = scmp.eq.s32.totalorder %s22, 0
      %p49 = por %p47, %p48
      %s50 = ssub.s32 %s16, %s23
      %p51 = scmp.eq.s32.totalorder %s50, 0
      %s53 = sadd.s32 %s52, 1
      %s54 = scalar_select %p51, %s52, %s53
      %p57 = pneg %p51
      %p58 = scmp.eq.s32.totalorder %s16, 3
      %p59 = por %p57, %p58
      %p60 = scmp.ne.s32.totalorder %s52, %s55
      %p61 = scmp.eq.s32.totalorder %s16, 0
      %p62 = por %p60, %p61
      %p63 = scmp.ne.s32.totalorder %s52, %s55
      %p64 = scmp.eq.s32.totalorder %s21, 3
      %p65 = por %p63, %p64
      %p66 = scmp.ne.s32.totalorder %s55, %s56
      %p67 = scmp.eq.s32.totalorder %s21, 0
      %p68 = por %p66, %p67
      %p69 = scmp.ne.s32.totalorder %s55, %s56
      %p70 = scmp.eq.s32.totalorder %s22, 3
      %p71 = por %p69, %p70
      %p73 = scmp.ne.s32.totalorder %s56, %s72
      %p74 = scmp.eq.s32.totalorder %s22, 0
      %p75 = por %p73, %p74
      %s77 = sadd.s32 %s76, 1
      %p80 = scmp.eq.s32.totalorder %s16, 3
      %p81 = scmp.ne.s32.totalorder %s76, %s78
      %p82 = scmp.eq.s32.totalorder %s16, 0
      %p83 = por %p81, %p82
      %p84 = scmp.ne.s32.totalorder %s76, %s78
      %p85 = scmp.eq.s32.totalorder %s21, 3
      %p86 = por %p84, %p85
      %p87 = scmp.ne.s32.totalorder %s78, %s79
      %p88 = scmp.eq.s32.totalorder %s21, 0
      %p89 = por %p87, %p88
      %p90 = scmp.ne.s32.totalorder %s78, %s79
      %p91 = scmp.eq.s32.totalorder %s22, 3
      %p92 = por %p90, %p91
      %p94 = scmp.ne.s32.totalorder %s79, %s93
      %p95 = scmp.eq.s32.totalorder %s22, 0
      %p96 = por %p94, %p95
      %s98 = sadd.s32 %s97, 1
      %p101 = scmp.eq.s32.totalorder %s16, 3
      %p102 = scmp.ne.s32.totalorder %s97, %s99
      %p103 = scmp.eq.s32.totalorder %s16, 0
      %p104 = por %p102, %p103
      %p105 = scmp.ne.s32.totalorder %s97, %s99
      %p106 = scmp.eq.s32.totalorder %s21, 3
      %p107 = por %p105, %p106
      %p108 = scmp.ne.s32.totalorder %s99, %s100
      %p109 = scmp.eq.s32.totalorder %s21, 0
      %p110 = por %p108, %p109
      %p111 = scmp.ne.s32.totalorder %s99, %s100
      %p112 = scmp.eq.s32.totalorder %s22, 3
      %p113 = por %p111, %p112
      %p115 = scmp.ne.s32.totalorder %s100, %s114
      %p116 = scmp.eq.s32.totalorder %s22, 0
      %p117 = por %p115, %p116
      %s119 = sadd.s32 %s118, 1
      %p122 = scmp.eq.s32.totalorder %s16, 3
      %p123 = scmp.ne.s32.totalorder %s118, %s120
      %p124 = scmp.eq.s32.totalorder %s16, 0
      %p125 = por %p123, %p124
      %p126 = scmp.ne.s32.totalorder %s118, %s120
      %p127 = scmp.eq.s32.totalorder %s21, 3
      %p128 = por %p126, %p127
      %p129 = scmp.ne.s32.totalorder %s120, %s121
      %p130 = scmp.eq.s32.totalorder %s21, 0
      %p131 = por %p129, %p130
      %p132 = scmp.ne.s32.totalorder %s120, %s121
      %p133 = scmp.eq.s32.totalorder %s22, 3
      %p134 = por %p132, %p133
      %p136 = scmp.ne.s32.totalorder %s121, %s135
      %p137 = scmp.eq.s32.totalorder %s22, 0
      %p138 = por %p136, %p137
      %s140 = sadd.s32 %s139, 1
      %p143 = scmp.eq.s32.totalorder %s16, 3
      %p144 = scmp.ne.s32.totalorder %s139, %s141
      %p145 = scmp.eq.s32.totalorder %s16, 0
      %p146 = por %p144, %p145
      %p147 = scmp.ne.s32.totalorder %s139, %s141
      %p148 = scmp.eq.s32.totalorder %s21, 3
      %p149 = por %p147, %p148
      %p150 = scmp.ne.s32.totalorder %s141, %s142
      %p151 = scmp.eq.s32.totalorder %s21, 0
      %p152 = por %p150, %p151
      %p153 = scmp.ne.s32.totalorder %s141, %s142
      %p154 = scmp.eq.s32.totalorder %s22, 3
      %p155 = por %p153, %p154
      %p157 = scmp.ne.s32.totalorder %s142, %s156
      %p158 = scmp.eq.s32.totalorder %s22, 0
      %p159 = por %p157, %p158
      %s161 = sadd.s32 %s160, 1
      %p164 = scmp.eq.s32.totalorder %s16, 3
      %p165 = scmp.ne.s32.totalorder %s160, %s162
      %p166 = scmp.eq.s32.totalorder %s16, 0
      %p167 = por %p165, %p166
      %p168 = scmp.ne.s32.totalorder %s160, %s162
      %p169 = scmp.eq.s32.totalorder %s21, 3
      %p170 = por %p168, %p169
      %p171 = scmp.ne.s32.totalorder %s162, %s163
      %p172 = scmp.eq.s32.totalorder %s21, 0
      %p173 = por %p171, %p172
      %p174 = scmp.ne.s32.totalorder %s162, %s163
      %p175 = scmp.eq.s32.totalorder %s22, 3
      %p176 = por %p174, %p175
      %p178 = scmp.ne.s32.totalorder %s163, %s177
      %p179 = scmp.eq.s32.totalorder %s22, 0
      %p180 = por %p178, %p179
      %s181 = ssub.s32 %s16, %s23
      %p182 = scmp.eq.s32.totalorder %s181, 0
      %s184 = sadd.s32 %s183, 1
      %s185 = scalar_select %p182, %s183, %s184
      %p188 = pneg %p182
      %p189 = scmp.eq.s32.totalorder %s16, 3
      %p190 = por %p188, %p189
      %p191 = scmp.ne.s32.totalorder %s183, %s186
      %p192 = scmp.eq.s32.totalorder %s16, 0
      %p193 = por %p191, %p192
      %p194 = scmp.ne.s32.totalorder %s183, %s186
      %p195 = scmp.eq.s32.totalorder %s21, 3
      %p196 = por %p194, %p195
      %p197 = scmp.ne.s32.totalorder %s186, %s187
      %p198 = scmp.eq.s32.totalorder %s21, 0
      %p199 = por %p197, %p198
      %p200 = scmp.ne.s32.totalorder %s186, %s187
      %p201 = scmp.eq.s32.totalorder %s22, 3
      %p202 = por %p200, %p201
      %p204 = scmp.ne.s32.totalorder %s187, %s203
      %p205 = scmp.eq.s32.totalorder %s22, 0
      %p206 = por %p204, %p205
      %p207 = scmp.le.s32.totalorder 1, %s16
      %p208 = scmp.lt.s32.totalorder %s16, 5
      %p209 = pnand %p207, %p208
      %p210 = pneg %p209
      // Predicated region
      $region9: #{tpu_custom_call.1} parent=5 // pred_check
        _
      $region10: #{tpu_custom_call.1} parent=5 // pred_check_branch
        %212 = sbr.rel (%p209) target = $region12
      $region11: #{tpu_custom_call.1} parent=5 // pred_region
        %s213 = ssub.s32 %s16, 1
        // Predicated region
        $region13: #{tpu_custom_call.1} parent=11 // pred_check
          %p214 = pneg %p89
        $region14: #{tpu_custom_call.1} parent=11 // pred_check_branch
          %216 = sbr.rel (%p214) target = $region16
        $region15: #{tpu_custom_call.1} parent=11 // pred_region
          _
        $region16: #{tpu_custom_call.1} parent=11 // pred_fallthru
          _
        // Predicated region
        $region17: #{tpu_custom_call.1} parent=11 // pred_check
          %p217 = pneg %p110
        $region18: #{tpu_custom_call.1} parent=11 // pred_check_branch
          %219 = sbr.rel (%p217) target = $region20
        $region19: #{tpu_custom_call.1} parent=11 // pred_region
          _
        $region20: #{tpu_custom_call.1} parent=11 // pred_fallthru
          _
        // Predicated region
        $region21: #{tpu_custom_call.1} parent=11 // pred_check
          %p220 = pneg %p131
        $region22: #{tpu_custom_call.1} parent=11 // pred_check_branch
          %222 = sbr.rel (%p220) target = $region24
        $region23: #{tpu_custom_call.1} parent=11 // pred_region
          _
        $region24: #{tpu_custom_call.1} parent=11 // pred_fallthru
          _
        // Predicated region
        $region25: #{tpu_custom_call.1} parent=11 // pred_check
          %p223 = pneg %p152
        $region26: #{tpu_custom_call.1} parent=11 // pred_check_branch
          %225 = sbr.rel (%p223) target = $region28
        $region27: #{tpu_custom_call.1} parent=11 // pred_region
          _
        $region28: #{tpu_custom_call.1} parent=11 // pred_fallthru
          _
        // Predicated region
        $region29: #{tpu_custom_call.1} parent=11 // pred_check
          %p226 = pneg %p173
        $region30: #{tpu_custom_call.1} parent=11 // pred_check_branch
          %228 = sbr.rel (%p226) target = $region32
        $region31: #{tpu_custom_call.1} parent=11 // pred_region
          _
        $region32: #{tpu_custom_call.1} parent=11 // pred_fallthru
          _
      $region12: #{tpu_custom_call.1} parent=5 // pred_fallthru
        _
      %p229 = scmp.lt.s32.totalorder %s16, 4
      // Predicated region
      $region33: #{tpu_custom_call.1} parent=5 // pred_check
        %p230 = pneg %p229
      $region34: #{tpu_custom_call.1} parent=5 // pred_check_branch
        %232 = sbr.rel (%p230) target = $region36
      $region35: #{tpu_custom_call.1} parent=5 // pred_region
        // Predicated region
        $region37: #{tpu_custom_call.1} parent=35 // pred_check
          %p233 = pneg %p36
        $region38: #{tpu_custom_call.1} parent=35 // pred_check_branch
          %235 = sbr.rel (%p233) target = $region40
        $region39: #{tpu_custom_call.1} parent=35 // pred_region
          %s236 = smul.u32 2, %s16
          %p237 = scmp.lt.s32.totalorder %s236, 7
          %s238 = scalar_select %p237, %s236, 7
          %s239 = smul.addr %s238, 8
          %s240 = scalar_lea.vmem %s0, %s239
          %s241 = smul.u32 2, %s16
        $region40: #{tpu_custom_call.1} parent=35 // pred_fallthru
          _
        // Predicated region
        $region41: #{tpu_custom_call.1} parent=35 // pred_check
          %p242 = pneg %p62
        $region42: #{tpu_custom_call.1} parent=35 // pred_check_branch
          %244 = sbr.rel (%p242) target = $region44
        $region43: #{tpu_custom_call.1} parent=35 // pred_region
          %s245 = smul.u32 2, %s16
          %p246 = scmp.lt.s32.totalorder %s245, 7
          %s247 = scalar_select %p246, %s245, 7
          %s248 = smul.addr %s247, 8
          %s249 = scalar_lea.vmem %s1, %s248
          %s250 = smul.u32 2, %s16
        $region44: #{tpu_custom_call.1} parent=35 // pred_fallthru
          _
      $region36: #{tpu_custom_call.1} parent=5 // pred_fallthru
        _
      %p251 = scmp.le.s32.totalorder 1, %s16
      %p252 = scmp.lt.s32.totalorder %s16, 5
      %p253 = pnand %p251, %p252
      %p254 = pneg %p253
      // Predicated region
      $region45: #{tpu_custom_call.1} parent=5 // pred_check
        _
      $region46: #{tpu_custom_call.1} parent=5 // pred_check_branch
        %256 = sbr.rel (%p253) target = $region48
      $region47: #{tpu_custom_call.1} parent=5 // pred_region
        %s257 = ssub.s32 %s16, 1
        %s258 = smul.u32 2, %s21
        %p259 = scmp.lt.s32.totalorder %s258, 7
        %s260 = scalar_select %p259, %s258, 7
        %s261 = smul.addr %s260, 8
        %s262 = scalar_lea.vmem %s0, %s261
        %p263 = pneg %p42
        %p264 = pneg %p39
        %s265 = smul.u32 2, %s21
        %p266 = scmp.lt.s32.totalorder %s265, 7
        %s267 = scalar_select %p266, %s265, 7
        %s268 = smul.addr %s267, 8
        %s269 = scalar_lea.vmem %s1, %s268
        %p270 = pneg %p68
        %p271 = pneg %p65
        %p272 = pneg %p89
        %p273 = pneg %p86
        %p274 = pneg %p110
        %p275 = pneg %p107
        %p276 = pneg %p131
        %p277 = pneg %p128
        %p278 = pneg %p152
        %p279 = pneg %p149
        %p280 = pneg %p173
        %p281 = pneg %p170
        %p282 = pneg %p199
        %p283 = pneg %p196
        %s284 = sand.u32 %s186, 1
        %s285 = scalar_lea.sflag [#allocation3], %s284
        %s286 = sand.u32 %s186, 1
        %s287 = smul.addr %s286, 16
        %s288 = scalar_lea.vmem [#allocation2], %s287
        %s289 = smul.u32 2, %s21
        %p290 = scmp.lt.s32.totalorder %s289, 7
        %s291 = scalar_select %p290, %s289, 7
        %s292 = smul.addr %s291, 8
        %s293 = scalar_lea.vmem %s0, %s292
        %s294 = smul.u32 2, %s21
        %s295 = smul.u32 2, %s21
        %p296 = scmp.lt.s32.totalorder %s295, 7
        %s297 = scalar_select %p296, %s295, 7
        %s298 = smul.addr %s297, 8
        %s299 = scalar_lea.vmem %s1, %s298
        %s300 = smul.u32 2, %s21
        %s301 = smul.u32 2, %s21
        %v302 = vld [vmem:[%s293] sm:$0xff]
        %v303 = vld [vmem:[%s293 + $0x8] sm:$0xff]
        %v304 = vld [vmem:[%s2] sm:$0xff]
        %v305 = vld [vmem:[%s299] sm:$0xff]
        %v306 = vld [vmem:[%s299 + $0x8] sm:$0xff]
        %v307 = vld [vmem:[%s3] sm:$0xff]
        %vm308 = vcmask 64512
        %v310 = vsel %vm308, %v305, 0
        %v313 = vsel %vm308, %v306, 0
        %315 = vmatpush.msra.mxu0 0.0
        %316 = vmatpush.msra.mxu0 0.0
        %317 = vmatpush.msra.mxu0 0.0
        %318 = vmatpush.msra.mxu0 0.0
        %319 = vmatpush.msra.mxu0 0.0
        %320 = vmatpush.msra.mxu0 0.0
        %321 = vmatpush.msra.mxu0 0.0
        %322 = vmatpush.msra.mxu0 0.0
        %323 = vmatpush.msra.mxu0 0.0
        %324 = vmatpush.msra.mxu0 0.0
        %325 = vmatpush.msra.mxu0 0.0
        %326 = vmatpush.msra.mxu0 0.0
        %327 = vmatpush.msra.mxu0 0.0
        %328 = vmatpush.msra.mxu0 0.0
        %329 = vmatpush.msra.mxu0 0.0
        %330 = vmatpush.msra.mxu0 %v307
        %331 = vmatmul.f32.gmra.mxu0 %v310
        %v332 = vpop.f32.mrf.mxu0
        %v333 = vadd.f32 0.0, %v332
        %334 = vmatmul.f32.gmra.mxu0 %v313
        %v335 = vpop.f32.mrf.mxu0
        %v336 = vadd.f32 0.0, %v335
        %337 = vdwg.mxu0
        %v339 = vsel %vm308, %v302, 0
        %v342 = vsel %vm308, %v303, 0
        %344 = vmatpush.msra.mxu0 0.0
        %345 = vmatpush.msra.mxu0 0.0
        %346 = vmatpush.msra.mxu0 0.0
        %347 = vmatpush.msra.mxu0 0.0
        %348 = vmatpush.msra.mxu0 0.0
        %349 = vmatpush.msra.mxu0 0.0
        %350 = vmatpush.msra.mxu0 0.0
        %351 = vmatpush.msra.mxu0 0.0
        %352 = vmatpush.msra.mxu0 0.0
        %353 = vmatpush.msra.mxu0 0.0
        %354 = vmatpush.msra.mxu0 0.0
        %355 = vmatpush.msra.mxu0 0.0
        %356 = vmatpush.msra.mxu0 0.0
        %357 = vmatpush.msra.mxu0 0.0
        %358 = vmatpush.msra.mxu0 0.0
        %359 = vmatpush.msra.mxu0 %v304
        %360 = vmatmul.f32.gmra.mxu0 %v339
        %v361 = vpop.f32.mrf.mxu0
        %v362 = vadd.f32 %v333, %v361
        %363 = vmatmul.f32.gmra.mxu0 %v342
        %v364 = vpop.f32.mrf.mxu0
        %v365 = vadd.f32 %v336, %v364
        %366 = vdwg.mxu0
        %v367 = vld [vmem:[%s4] sm:$0x1]
        %v369 = vperm.slane %v367, 0
        %v371 = vadd.f32 %v362, %v369
        %v372 = vadd.f32 %v365, %v369
        %v373 = vmax.f32 %v371, 0.0
        %v374 = vmax.f32 %v372, 0.0
        %v375 = vld [vmem:[%s5] sm:$0xff]
        %v376 = vld [vmem:[%s5 + $0x8] sm:$0xff]
        %v377 = vld [vmem:[%s5 + $0x10] sm:$0xff]
        %v378 = vld [vmem:[%s5 + $0x18] sm:$0xff]
        %v379 = vld [vmem:[%s5 + $0x20] sm:$0xff]
        %v380 = vld [vmem:[%s5 + $0x28] sm:$0xff]
        %v381 = vld [vmem:[%s5 + $0x30] sm:$0xff]
        %v382 = vld [vmem:[%s5 + $0x38] sm:$0xff]
        %v383 = vld [vmem:[%s6] sm:$0x1]
        %v385 = vperm.slane %v383, 0
        %vm387 = vcmask 523264
        %v389 = vsel %vm387, %v373, 0
        %v392 = vsel %vm387, %v374, 0
        %394 = vmatpush.msra.mxu0 0.0
        %395 = vmatpush.msra.mxu0 0.0
        %396 = vmatpush.msra.mxu0 0.0
        %397 = vmatpush.msra.mxu0 0.0
        %398 = vmatpush.msra.mxu0 0.0
        %399 = vmatpush.msra.mxu0 0.0
        %400 = vmatpush.msra.mxu0 0.0
        %401 = vmatpush.msra.mxu0 0.0
        %402 = vmatpush.msra.mxu0 %v382
        %403 = vmatpush.msra.mxu0 %v381
        %404 = vmatpush.msra.mxu0 %v380
        %405 = vmatpush.msra.mxu0 %v379
        %406 = vmatpush.msra.mxu0 %v378
        %407 = vmatpush.msra.mxu0 %v377
        %408 = vmatpush.msra.mxu0 %v376
        %409 = vmatpush.msra.mxu0 %v375
        %410 = vmatmul.f32.gmra.mxu0 %v389
        %v411 = vpop.f32.mrf.mxu0
        %v412 = vadd.f32 %v385, %v411
        %413 = vmatmul.f32.gmra.mxu0 %v392
        %v414 = vpop.f32.mrf.mxu0
        %v415 = vadd.f32 %v385, %v414
        %416 = vdwg.mxu0
        %v417 = vsub.f32 0.0, %v412
        %v418 = vsub.f32 0.0, %v415
        %v419 = vmul.f32 %v417, 1.442695
        %v420 = vpow.pop %v419
        %v421 = vmul.f32 %v418, 1.442695
        %v422 = vpow.pop %v421
        %v423 = vadd.f32 %v420, 1.0
        %v424 = vadd.f32 %v422, 1.0
        %v425 = vrcp.pop %v423
        %v426 = vmul.f32 %v423, %v425
        %v427 = vsub.f32 1.0, %v426
        %v428 = vmul.f32 %v425, %v427
        %v429 = vadd.f32 %v425, %v428
        %vm430 = vweird.f32 %v423
        %vm431 = vweird.f32 %v425
        %vm432 = vmor %vm430, %vm431
        %v433 = vsel %vm432, %v425, %v429
        %v434 = vand.u32 2147483647, %v423
        %vm435 = vcmp.eq.f32.partialorder %v434, 8.507059e+37
        %v436 = vand.u32 %v423, 2147483648
        %v437 = vor.u32 1.1754944e-38, %v436
        %v438 = vsel %vm435, %v437, %v433
        %v439 = vmul.f32 1.0, %v438
        %v440 = vrcp.pop %v424
        %v441 = vmul.f32 %v424, %v440
        %v442 = vsub.f32 1.0, %v441
        %v443 = vmul.f32 %v440, %v442
        %v444 = vadd.f32 %v440, %v443
        %vm445 = vweird.f32 %v424
        %vm446 = vweird.f32 %v440
        %vm447 = vmor %vm445, %vm446
        %v448 = vsel %vm447, %v440, %v444
        %v449 = vand.u32 2147483647, %v424
        %vm450 = vcmp.eq.f32.partialorder %v449, 8.507059e+37
        %v451 = vand.u32 %v424, 2147483648
        %v452 = vor.u32 1.1754944e-38, %v451
        %v453 = vsel %vm450, %v452, %v448
        %v454 = vmul.f32 1.0, %v453
        %455 = vst [vmem:[%s288] sm:$0xff] %v439
        %456 = vst [vmem:[%s288 + $0x8] sm:$0xff] %v454
        %s457 = sand.u32 %s186, 1
        %s458 = scalar_lea.sflag [#allocation3], %s457
        %s459 = sand.u32 %s186, 1
        %s460 = smul.addr %s459, 16
        %s461 = scalar_lea.vmem [#allocation2], %s460
        // Predicated region
        $region49: #{tpu_custom_call.1} parent=47 // pred_check
          %p462 = pneg %p196
        $region50: #{tpu_custom_call.1} parent=47 // pred_check_branch
          %464 = sbr.rel (%p462) target = $region52
        $region51: #{tpu_custom_call.1} parent=47 // pred_region
          %s465 = smul.u32 2, %s21
          %467 = vsyncadd %s458, 0
          %s468 = smul.addr %s465, 8
          %s469 = scalar_lea.hbm %s7, %s468
          %s470 = sshll.u32 %s461, 4
          %s471 = int_to_ptr.vmem [resolvable:$true] %s470
          %s472 = sshll.u32 %s469, 4
          %s473 = int_to_ptr.hbm [resolvable:$true] %s472
          %478 = dma.vmem_to_hbm [thread:$0]  %s471, 256, %s473, %s458, 128, 128, 8
        $region52: #{tpu_custom_call.1} parent=47 // pred_fallthru
          _
      $region48: #{tpu_custom_call.1} parent=5 // pred_fallthru
        _
      %p479 = scmp.le.s32.totalorder 2, %s16
      // Predicated region
      $region53: #{tpu_custom_call.1} parent=5 // pred_check
        %p480 = pneg %p479
      $region54: #{tpu_custom_call.1} parent=5 // pred_check_branch
        %482 = sbr.rel (%p480) target = $region56
      $region55: #{tpu_custom_call.1} parent=5 // pred_region
        %s483 = ssub.s32 %s16, 2
        // Predicated region
        $region57: #{tpu_custom_call.1} parent=55 // pred_check
          %p484 = pneg %p202
        $region58: #{tpu_custom_call.1} parent=55 // pred_check_branch
          %486 = sbr.rel (%p484) target = $region60
        $region59: #{tpu_custom_call.1} parent=55 // pred_region
          %s487 = sand.u32 %s187, 1
          %s488 = scalar_lea.sflag [#allocation3], %s487
          %s489 = sand.u32 %s187, 1
          %s490 = smul.addr %s489, 16
          %s491 = scalar_lea.vmem [#allocation2], %s490
          %493 = dma.done %s488, 256
        $region60: #{tpu_custom_call.1} parent=55 // pred_fallthru
          _
      $region56: #{tpu_custom_call.1} parent=5 // pred_fallthru
        _
    $region6: #{tpu_custom_call.1} parent=1 // loop_footer
      %s20 = sadd.s32 1, %s16
    $region7: #{tpu_custom_call.1} parent=1 // loop_footer_branch
      %15 = sbr.rel target = $region3
    $region8: #{tpu_custom_call.1} parent=1 // loop_exit
      _
    %494 = vsyncpa [#allocation3], 1
    %s495 = scalar_lea.sflag [#allocation3], 1
    %496 = vsyncpa %s495, 1

</llo_original>
